<compile_context>
chip_gen: v7x
topology: tpu7x:2x2x1
jax: 0.10.0
libtpu: 0.0.40
codegen_flags: <defaults>
</compile_context>

<pallas_src>
import functools
import math

import jax
import jax.numpy as jnp
from jax.experimental import pallas as pl
from jax.experimental.pallas import tpu as pltpu


def _cdiv(a, b):
    return (a + b - 1) // b


def _plan_tiles(batch, dim, itemsize, *, budget_bytes=24 << 20, max_rows=8192):
    """Pick (fold, lane, rows_per_tile, n_tiles, rows_pad).

    fold = how many batch examples share one 128-wide lane row; rows are rows
    of the folded (batch/fold, fold*dim) slab.  The budget covers the three
    double-buffered input blocks (dtype-aware).
    """
    if dim % 128 == 0:
        fold = 1                       # already lane-dense
    elif dim < 128 and 128 % dim == 0:
        fold = 128 // dim              # pack several examples per lane row
    else:
        fold = 1                       # odd dim: accept lane padding
    lane = fold * dim
    lane_padded = _cdiv(lane, 128) * 128        # VMEM lane padding for budgeting

    bytes_per_row = 3 * 2 * lane_padded * itemsize   # 3 inputs x 2 pipeline bufs
    rows_cap = max(8, min(max_rows, budget_bytes // bytes_per_row))

    rows_needed = _cdiv(batch, fold)
    n_tiles = _cdiv(rows_needed, rows_cap)
    if n_tiles > 1:
        # Even tile count -> balanced split across v7x's two TensorCores on the
        # "parallel" batch axis (neutral on v5e/v6e).
        n_tiles = 2 * _cdiv(n_tiles, 2)
    rows_per_tile = max(8, _cdiv(_cdiv(rows_needed, n_tiles), 8) * 8)
    rows_pad = n_tiles * rows_per_tile
    return fold, lane, rows_per_tile, n_tiles, rows_pad


def transe_kernel(h_ref, r_ref, t_ref, o_ref, *, dim, fold):
    """Blocks: h/r/t are (TBR, fold*dim); o is (TBR, fold).

    Each lane row packs `fold` consecutive examples; example g owns lanes
    [g*dim, (g+1)*dim).  f32 compute regardless of the stored table dtype.
    """
    h = h_ref[...].astype(jnp.float32)
    r = r_ref[...].astype(jnp.float32)
    t = t_ref[...].astype(jnp.float32)
    d = h + r - t                                  # VPU, lane-dense
    d2 = d * d

    if fold == 1:
        o_ref[...] = jnp.sqrt(jnp.sum(d2, axis=1, keepdims=True))
        return

    lane = jax.lax.broadcasted_iota(jnp.int32, d2.shape, 1)
    for g in range(fold):                          # static unroll (fold is small)
        mask = (lane >= g * dim) & (lane < (g + 1) * dim)
        s = jnp.sum(jnp.where(mask, d2, 0.0), axis=1, keepdims=True)  # (TBR, 1)
        o_ref[:, g:g + 1] = jnp.sqrt(s)            # sqrt -> EUP


def transe_forward(entity_emb, relation_emb, head, relation, tail):
    """Pallas-backed TransE score: returns (B,) float32 distances."""
    B = head.shape[0]
    D = entity_emb.shape[1]
    itemsize = jnp.dtype(entity_emb.dtype).itemsize

    fold, lane, tbr, n_tiles, rows_pad = _plan_tiles(B, D, itemsize)
    b_pad = rows_pad * fold

    if b_pad != B:
        pad = b_pad - B
        # Pad with index 0 (a valid row); padded tail columns compute finite
        # garbage and are sliced off below.
        head = jnp.pad(head, (0, pad))
        relation = jnp.pad(relation, (0, pad))
        tail = jnp.pad(tail, (0, pad))

    # Embedding-row gather (nn.Embedding lookup).  No transpose: the (b_pad, D)
    # row-major slab is reshaped for free into a lane-dense (rows_pad, lane)
    # slab that the kernel consumes directly.
    h = jnp.take(entity_emb, head, axis=0).reshape(rows_pad, lane)
    r = jnp.take(relation_emb, relation, axis=0).reshape(rows_pad, lane)
    t = jnp.take(entity_emb, tail, axis=0).reshape(rows_pad, lane)

    cost = pl.CostEstimate(
        flops=4 * rows_pad * lane,                 # add, sub, mul, reduce-add
        transcendentals=rows_pad * fold,           # sqrt per example
        bytes_accessed=3 * rows_pad * lane * itemsize + rows_pad * fold * 4,
    )

    out = pl.pallas_call(
        functools.partial(transe_kernel, dim=D, fold=fold),
        out_shape=jax.ShapeDtypeStruct((rows_pad, fold), jnp.float32),
        grid=(n_tiles,),
        in_specs=[
            pl.BlockSpec((tbr, lane), lambda i: (i, 0)),
            pl.BlockSpec((tbr, lane), lambda i: (i, 0)),
            pl.BlockSpec((tbr, lane), lambda i: (i, 0)),
        ],
        out_specs=pl.BlockSpec((tbr, fold), lambda i: (i, 0)),
        compiler_params=pltpu.CompilerParams(
            dimension_semantics=("parallel",),
            vmem_limit_bytes=40 << 20,   # > v5e's 16 MiB scoped default, < v7x's 64 MiB physical
        ),
        cost_estimate=cost,
    )(h, r, t)

    return out.reshape(rows_pad * fold)[:B]        # (B,) float32


def init_transe_params(key, num_entities, num_relations, embedding_dim):
    """Deterministic uniform(-6/sqrt(d), 6/sqrt(d)) init, matching the module."""
    bound = 6.0 / math.sqrt(embedding_dim)
    k_ent, k_rel = jax.random.split(key)
    entity_emb = jax.random.uniform(
        k_ent, (num_entities, embedding_dim), jnp.float32, -bound, bound
    )
    relation_emb = jax.random.uniform(
        k_rel, (num_relations, embedding_dim), jnp.float32, -bound, bound
    )
    return entity_emb, relation_emb


if __name__ == "__main__":
    num_entities, num_relations, embedding_dim = 64, 16, 32
    batch = 16

    key = jax.random.PRNGKey(0)
    k_params, k_h, k_r, k_t = jax.random.split(key, 4)

    entity_emb, relation_emb = init_transe_params(
        k_params, num_entities, num_relations, embedding_dim
    )

    head = jax.random.randint(k_h, (batch,), 0, num_entities, dtype=jnp.int32)
    relation = jax.random.randint(k_r, (batch,), 0, num_relations, dtype=jnp.int32)
    tail = jax.random.randint(k_t, (batch,), 0, num_entities, dtype=jnp.int32)

    fwd = jax.jit(transe_forward)
    scores = fwd(entity_emb, relation_emb, head, relation, tail)
    scores = jax.block_until_ready(scores)

    # Pure-JAX reference of the forward semantics (torch.norm(h + r - t, p=2, dim=1)).
    ref = jnp.linalg.norm(
        jnp.take(entity_emb, head, axis=0)
        + jnp.take(relation_emb, relation, axis=0)
        - jnp.take(entity_emb, tail, axis=0),
        ord=2,
        axis=1,
    )
    assert scores.shape == (batch,)
    assert jnp.allclose(scores, ref, atol=1e-5, rtol=1e-5)

    print("KERNEL_OK")
</pallas_src>

<mosaic_0001>
module attributes {stable_mosaic.version = 11 : i64} {
  func.func @transe_kernel(%arg0: i32, %arg1: memref<8x128xf32, #tpu.memory_space<vmem>>, %arg2: memref<8x128xf32, #tpu.memory_space<vmem>>, %arg3: memref<8x128xf32, #tpu.memory_space<vmem>>, %arg4: memref<8x4xf32, #tpu.memory_space<vmem>>) attributes {dimension_semantics = [#tpu.dimension_semantics<parallel>], iteration_bounds = array<i64: 1>, scalar_prefetch = 0 : i64, scratch_operands = 0 : i64, tpu.core_type = #tpu.core_type<tc>, window_params = [{transform_indices = @transform_0, window_bounds = array<i64: 8, 128>}, {transform_indices = @transform_1, window_bounds = array<i64: 8, 128>}, {transform_indices = @transform_2, window_bounds = array<i64: 8, 128>}, {transform_indices = @transform_3, window_bounds = array<i64: 8, 4>}]} {
    %c0 = arith.constant 0 : index
    %c0_0 = arith.constant 0 : index
    %0 = vector.load %arg1[%c0, %c0_0] : memref<8x128xf32, #tpu.memory_space<vmem>>, vector<8x128xf32>
    %c0_1 = arith.constant 0 : index
    %c0_2 = arith.constant 0 : index
    %1 = vector.load %arg2[%c0_1, %c0_2] : memref<8x128xf32, #tpu.memory_space<vmem>>, vector<8x128xf32>
    %c0_3 = arith.constant 0 : index
    %c0_4 = arith.constant 0 : index
    %2 = vector.load %arg3[%c0_3, %c0_4] : memref<8x128xf32, #tpu.memory_space<vmem>>, vector<8x128xf32>
    %3 = arith.addf %0, %1 : vector<8x128xf32>
    %4 = arith.subf %3, %2 : vector<8x128xf32>
    %5 = arith.mulf %4, %4 : vector<8x128xf32>
    %6 = tpu.iota {dimensions = array<i32: 1>} : vector<8x128xi32>
    %c0_i32 = arith.constant 0 : i32
    %7 = vector.broadcast %c0_i32 : i32 to vector<8x128xi32>
    %8 = arith.cmpi sge, %6, %7 : vector<8x128xi32>
    %c32_i32 = arith.constant 32 : i32
    %9 = vector.broadcast %c32_i32 : i32 to vector<8x128xi32>
    %10 = arith.cmpi slt, %6, %9 : vector<8x128xi32>
    %11 = arith.andi %8, %10 : vector<8x128xi1>
    %cst = arith.constant 0.000000e+00 : f32
    %12 = vector.broadcast %cst : f32 to vector<8x128xf32>
    %13 = arith.select %11, %5, %12 : vector<8x128xi1>, vector<8x128xf32>
    %cst_5 = arith.constant dense<0.000000e+00> : vector<8xf32>
    %14 = vector.multi_reduction <add>, %13, %cst_5 [1] : vector<8x128xf32> to vector<8xf32>
    %15 = vector.shape_cast %14 : vector<8xf32> to vector<8x1xf32>
    %16 = math.sqrt %15 : vector<8x1xf32>
    %c0_6 = arith.constant 0 : index
    %c0_7 = arith.constant 0 : index
    %17 = vector.load %arg4[%c0_6, %c0_7] : memref<8x4xf32, #tpu.memory_space<vmem>>, vector<8x1xf32>
    tpu.vector_store %arg4[%c0_6, %c0_7], %16 {strides = array<i32>} : memref<8x4xf32, #tpu.memory_space<vmem>>, vector<8x1xf32>,
    %c32_i32_8 = arith.constant 32 : i32
    %18 = vector.broadcast %c32_i32_8 : i32 to vector<8x128xi32>
    %19 = arith.cmpi sge, %6, %18 : vector<8x128xi32>
    %c64_i32 = arith.constant 64 : i32
    %20 = vector.broadcast %c64_i32 : i32 to vector<8x128xi32>
    %21 = arith.cmpi slt, %6, %20 : vector<8x128xi32>
    %22 = arith.andi %19, %21 : vector<8x128xi1>
    %cst_9 = arith.constant 0.000000e+00 : f32
    %23 = vector.broadcast %cst_9 : f32 to vector<8x128xf32>
    %24 = arith.select %22, %5, %23 : vector<8x128xi1>, vector<8x128xf32>
    %cst_10 = arith.constant dense<0.000000e+00> : vector<8xf32>
    %25 = vector.multi_reduction <add>, %24, %cst_10 [1] : vector<8x128xf32> to vector<8xf32>
    %26 = vector.shape_cast %25 : vector<8xf32> to vector<8x1xf32>
    %27 = math.sqrt %26 : vector<8x1xf32>
    %c0_11 = arith.constant 0 : index
    %c1 = arith.constant 1 : index
    %28 = vector.load %arg4[%c0_11, %c1] : memref<8x4xf32, #tpu.memory_space<vmem>>, vector<8x1xf32>
    tpu.vector_store %arg4[%c0_11, %c1], %27 {strides = array<i32>} : memref<8x4xf32, #tpu.memory_space<vmem>>, vector<8x1xf32>,
    %c64_i32_12 = arith.constant 64 : i32
    %29 = vector.broadcast %c64_i32_12 : i32 to vector<8x128xi32>
    %30 = arith.cmpi sge, %6, %29 : vector<8x128xi32>
    %c96_i32 = arith.constant 96 : i32
    %31 = vector.broadcast %c96_i32 : i32 to vector<8x128xi32>
    %32 = arith.cmpi slt, %6, %31 : vector<8x128xi32>
    %33 = arith.andi %30, %32 : vector<8x128xi1>
    %cst_13 = arith.constant 0.000000e+00 : f32
    %34 = vector.broadcast %cst_13 : f32 to vector<8x128xf32>
    %35 = arith.select %33, %5, %34 : vector<8x128xi1>, vector<8x128xf32>
    %cst_14 = arith.constant dense<0.000000e+00> : vector<8xf32>
    %36 = vector.multi_reduction <add>, %35, %cst_14 [1] : vector<8x128xf32> to vector<8xf32>
    %37 = vector.shape_cast %36 : vector<8xf32> to vector<8x1xf32>
    %38 = math.sqrt %37 : vector<8x1xf32>
    %c0_15 = arith.constant 0 : index
    %c2 = arith.constant 2 : index
    %39 = vector.load %arg4[%c0_15, %c2] : memref<8x4xf32, #tpu.memory_space<vmem>>, vector<8x1xf32>
    tpu.vector_store %arg4[%c0_15, %c2], %38 {strides = array<i32>} : memref<8x4xf32, #tpu.memory_space<vmem>>, vector<8x1xf32>,
    %c96_i32_16 = arith.constant 96 : i32
    %40 = vector.broadcast %c96_i32_16 : i32 to vector<8x128xi32>
    %41 = arith.cmpi sge, %6, %40 : vector<8x128xi32>
    %c128_i32 = arith.constant 128 : i32
    %42 = vector.broadcast %c128_i32 : i32 to vector<8x128xi32>
    %43 = arith.cmpi slt, %6, %42 : vector<8x128xi32>
    %44 = arith.andi %41, %43 : vector<8x128xi1>
    %cst_17 = arith.constant 0.000000e+00 : f32
    %45 = vector.broadcast %cst_17 : f32 to vector<8x128xf32>
    %46 = arith.select %44, %5, %45 : vector<8x128xi1>, vector<8x128xf32>
    %cst_18 = arith.constant dense<0.000000e+00> : vector<8xf32>
    %47 = vector.multi_reduction <add>, %46, %cst_18 [1] : vector<8x128xf32> to vector<8xf32>
    %48 = vector.shape_cast %47 : vector<8xf32> to vector<8x1xf32>
    %49 = math.sqrt %48 : vector<8x1xf32>
    %c0_19 = arith.constant 0 : index
    %c3 = arith.constant 3 : index
    %50 = vector.load %arg4[%c0_19, %c3] : memref<8x4xf32, #tpu.memory_space<vmem>>, vector<8x1xf32>
    tpu.vector_store %arg4[%c0_19, %c3], %49 {strides = array<i32>} : memref<8x4xf32, #tpu.memory_space<vmem>>, vector<8x1xf32>,
    return
  }
  func.func @transform_0(%arg0: i32) -> (i32, i32) {
    %c0_i32 = arith.constant 0 : i32
    %c0_i32_0 = arith.constant 0 : i32
    return %arg0, %c0_i32 : i32, i32
  }
  func.func @transform_1(%arg0: i32) -> (i32, i32) {
    %c0_i32 = arith.constant 0 : i32
    %c0_i32_0 = arith.constant 0 : i32
    return %arg0, %c0_i32 : i32, i32
  }
  func.func @transform_2(%arg0: i32) -> (i32, i32) {
    %c0_i32 = arith.constant 0 : i32
    %c0_i32_0 = arith.constant 0 : i32
    return %arg0, %c0_i32 : i32, i32
  }
  func.func @transform_3(%arg0: i32) -> (i32, i32) {
    %c0_i32 = arith.constant 0 : i32
    %c0_i32_0 = arith.constant 0 : i32
    return %arg0, %c0_i32 : i32, i32
  }
}

</mosaic_0001>

<llo_original>
// kernel: transe_forward.1
$region0: #{transe_forward.1}
  #allocation0 [shape = 'u32[]', space=smem, size = 0x4, offset = 0x4, fixed_abs, tag = 'smem constant byte address 0x4 - core index']
  #allocation1 [shape = 'u32[144,128]{1,0:T(1,128)}', space=vmem, size = 0x12000, scoped, tag = 'internal scratch']
  %s0 = inlined_call_operand.vmem [shape: f32[8,128], index: 0, kind: input, shape index: {}]
  %s1 = inlined_call_operand.vmem [shape: f32[8,128], index: 1, kind: input, shape index: {}]
  %s2 = inlined_call_operand.vmem [shape: f32[8,128], index: 2, kind: input, shape index: {}]
  %s3 = inlined_call_operand.vmem [shape: f32[8,4], index: 3, kind: output, shape index: {}]
  %s4 = sld [smem:[#allocation0]]
  $region22: #{transe_forward.1} parent=0
    _
  %s6 = ssub.s32 1, %s4
  %s7 = scalar_select 0, %s6, %s4
  // Predicated region
  $region2: #{transe_forward.1} parent=0 // pred_check
    _
  $region3: #{transe_forward.1} parent=0 // pred_check_branch
    %9 = sbr.rel (0) target = $region5
  $region4: #{transe_forward.1} parent=0 // pred_region
    _
  $region5: #{transe_forward.1} parent=0 // pred_fallthru
    _
  // Predicated region
  $region6: #{transe_forward.1} parent=0 // pred_check
    _
  $region7: #{transe_forward.1} parent=0 // pred_check_branch
    %11 = sbr.rel (0) target = $region9
  $region8: #{transe_forward.1} parent=0 // pred_region
    _
  $region9: #{transe_forward.1} parent=0 // pred_fallthru
    _
  // Predicated region
  $region10: #{transe_forward.1} parent=0 // pred_check
    _
  $region11: #{transe_forward.1} parent=0 // pred_check_branch
    %13 = sbr.rel (0) target = $region13
  $region12: #{transe_forward.1} parent=0 // pred_region
    _
  $region13: #{transe_forward.1} parent=0 // pred_fallthru
    _
  %v14 = vld [vmem:[%s0] sm:$0xff]
  %v15 = vld [vmem:[%s1] sm:$0xff]
  %v16 = vld [vmem:[%s2] sm:$0xff]
  %v17 = vadd.f32 %v14, %v15
  %v18 = vsub.f32 %v17, %v16
  %v19 = vmul.f32 %v18, %v18
  %v20 = vlaneseq
  %v21 = vand.u32 %v20, 127
  %vm22 = vcmp.ge.s32.totalorder %v21, 0
  %vm23 = vcmp.lt.s32.totalorder %v21, 32
  %vm24 = vmand %vm22, %vm23
  %v25 = vsel %vm24, %v19, 0.0
  %26 = vadd.xlane.f32.xlu0 %v25
  %v27 = vpop.xlane.xlu0 %26
  %v28 = vrsqrt.pop %v27
  %v29 = vmul.f32 %v27, %v28
  %vm30 = vcmp.eq.f32.partialorder %v27, inf
  %v31 = vsel %vm30, %v27, %v29
  %vm32 = vcmp.eq.f32.partialorder %v27, 0.0
  %v33 = vand.u32 %v27, 2147483648
  %v34 = vsel %vm32, %v33, %v31
  %vm35 = vcmask 7168
  %36 = vst.msk [vmem:[%s3] sm:$0xff] %vm35, %v34
  %vm37 = vcmp.ge.s32.totalorder %v21, 32
  %vm38 = vcmp.lt.s32.totalorder %v21, 64
  %vm39 = vmand %vm37, %vm38
  %v40 = vsel %vm39, %v19, 0.0
  %41 = vadd.xlane.f32.xlu0 %v40
  %v42 = vpop.xlane.xlu0 %41
  %v43 = vrsqrt.pop %v42
  %v44 = vmul.f32 %v42, %v43
  %vm45 = vcmp.eq.f32.partialorder %v42, inf
  %v46 = vsel %vm45, %v42, %v44
  %vm47 = vcmp.eq.f32.partialorder %v42, 0.0
  %v48 = vand.u32 %v42, 2147483648
  %v49 = vsel %vm47, %v48, %v46
  %vm50 = vcmask 15368
  %51 = vst.msk [vmem:[%s3] sm:$0xff] %vm50, %v49
  %vm52 = vcmp.ge.s32.totalorder %v21, 64
  %vm53 = vcmp.lt.s32.totalorder %v21, 96
  %vm54 = vmand %vm52, %vm53
  %v55 = vsel %vm54, %v19, 0.0
  %56 = vadd.xlane.f32.xlu0 %v55
  %v57 = vpop.xlane.xlu0 %56
  %v58 = vrsqrt.pop %v57
  %v59 = vmul.f32 %v57, %v58
  %vm60 = vcmp.eq.f32.partialorder %v57, inf
  %v61 = vsel %vm60, %v57, %v59
  %vm62 = vcmp.eq.f32.partialorder %v57, 0.0
  %v63 = vand.u32 %v57, 2147483648
  %v64 = vsel %vm62, %v63, %v61
  %vm65 = vcmask 23568
  %66 = vst.msk [vmem:[%s3] sm:$0xff] %vm65, %v64
  %vm67 = vcmp.ge.s32.totalorder %v21, 96
  %vm68 = vcmp.lt.s32.totalorder %v21, 128
  %vm69 = vmand %vm67, %vm68
  %v70 = vsel %vm69, %v19, 0.0
  %71 = vadd.xlane.f32.xlu0 %v70
  %v72 = vpop.xlane.xlu0 %71
  %v73 = vrsqrt.pop %v72
  %v74 = vmul.f32 %v72, %v73
  %vm75 = vcmp.eq.f32.partialorder %v72, inf
  %v76 = vsel %vm75, %v72, %v74
  %vm77 = vcmp.eq.f32.partialorder %v72, 0.0
  %v78 = vand.u32 %v72, 2147483648
  %v79 = vsel %vm77, %v78, %v76
  %vm80 = vcmask 31768
  %81 = vst.msk [vmem:[%s3] sm:$0xff] %vm80, %v79
  // Predicated region
  $region14: #{transe_forward.1} parent=0 // pred_check
    _
  $region15: #{transe_forward.1} parent=0 // pred_check_branch
    %83 = sbr.rel (0) target = $region17
  $region16: #{transe_forward.1} parent=0 // pred_region
    _
  $region17: #{transe_forward.1} parent=0 // pred_fallthru
    _
  // Predicated region
  $region18: #{transe_forward.1} parent=0 // pred_check
    _
  $region19: #{transe_forward.1} parent=0 // pred_check_branch
    %85 = sbr.rel (0) target = $region21
  $region20: #{transe_forward.1} parent=0 // pred_region
    _
  $region21: #{transe_forward.1} parent=0 // pred_fallthru
    _

</llo_original>
